<compile_context>
chip_gen: v7x
topology: tpu7x:2x2x1
jax: 0.10.0
libtpu: 0.0.40
codegen_flags: <defaults>
</compile_context>

<pallas_src>
import jax
import jax.numpy as jnp
from jax.experimental import pallas as pl
from jax.experimental.pallas import tpu as pltpu

BN_EPS = 1e-5
NUM_CLASSES = 10
C_PAD = 128            # class dim padded to one full lane group for the MXU/softmax
NEG_BIG = -1e30        # bias for padded classes -> exp() == 0 in softmax


def _round_up(n, m):
    return ((n + m - 1) // m) * m


def _vmem_limit_bytes():
    # Per-generation scoped-VMEM limit: ~half of physical VMEM, clamped to
    # [32 MiB, 96 MiB].  v7x (64 MiB phys) -> 32 MiB, v5e/v6e (128 MiB) -> 64 MiB.
    try:
        cap = int(pltpu.get_tpu_info().vmem_capacity_bytes)
    except Exception:
        cap = 64 * 1024 * 1024                      # conservative (v7x) fallback
    return max(32 * 1024 * 1024, min(cap // 2, 96 * 1024 * 1024))


# ---------------- shared in-kernel helpers ----------------

def _linear1(x_ref, w1_ref):
    # (TB,512)@(512,256) on the MXU in bf16, f32 accumulate.
    # Linear1 bias intentionally omitted: BatchNorm's mean subtraction cancels it.
    return jnp.dot(x_ref[...].astype(jnp.bfloat16), w1_ref[...],
                   preferred_element_type=jnp.float32)


def _bn_relu_fc_softmax(h, mean, var, g_ref, be_ref, w2_ref, b2_ref):
    # BatchNorm folded to one scale/shift, ReLU, Linear2 (bf16 MXU), softmax.
    h = h.astype(jnp.float32)
    scale = g_ref[...] * jax.lax.rsqrt(jnp.maximum(var, 0.0) + BN_EPS)  # (1,256)
    shift = be_ref[...] - mean * scale                                  # (1,256)
    a = jnp.maximum(h * scale + shift, 0.0)                             # (TB,256)
    logits = jnp.dot(a.astype(jnp.bfloat16), w2_ref[...],
                     preferred_element_type=jnp.float32) + b2_ref[...]  # (TB,128)
    m = jnp.max(logits, axis=1, keepdims=True)
    e = jnp.exp(logits - m)                 # padded lanes: exp(-1e30 - m) == 0
    p = e * pl.reciprocal(jnp.sum(e, axis=1, keepdims=True), approx=True)
    return p[:, :NUM_CLASSES]               # only the 10 real classes are stored


# ---------------- wrapper ----------------

def decoder_forward(x, w1, b1, gamma, beta, w2, b2, *,
                    block_b=2048, max_resident_rows=None):
    """x: (B, 512) f32 (bf16 also accepted). Returns (B, 10) f32 softmax probs.

    b1 is accepted for API fidelity with the PyTorch module but is unused:
    BatchNorm's mean subtraction cancels the Linear1 bias exactly.
    """
    del b1
    B, K = x.shape
    H = w1.shape[1]                                    # 256

    # --- param prep: bf16 weights for the MXU, class dim padded to 128 lanes ---
    w1b = w1.astype(jnp.bfloat16)                                        # (512,256)
    gr = gamma.reshape(1, H).astype(jnp.float32)
    br = beta.reshape(1, H).astype(jnp.float32)
    w2p = jnp.zeros((H, C_PAD), jnp.bfloat16).at[:, :NUM_CLASSES].set(
        w2.astype(jnp.bfloat16))
    b2p = jnp.full((1, C_PAD), NEG_BIG, jnp.float32).at[:, :NUM_CLASSES].set(
        b2.reshape(1, NUM_CLASSES).astype(jnp.float32))

    vmem_limit = _vmem_limit_bytes()
    inv_b = 1.0 / float(B)
    x_row_bytes = K * x.dtype.itemsize                 # bf16 x is used as-is
    weight_bytes = K * H * 2 + H * C_PAD * 2 + 4 * H * 4 + C_PAD * 4

    # ---------------- small batch: single fused kernel (all resident) ----------------
    fused_bytes = B * (x_row_bytes + H * 4 + C_PAD * 4) + weight_bytes
    if B <= block_b and fused_bytes <= vmem_limit // 2:
        def fused_kernel(x_ref, w1_ref, g_ref, be_ref, w2_ref, b2_ref, out_ref):
            h = _linear1(x_ref, w1_ref)                                  # (B,256) f32
            mean = jnp.mean(h, axis=0, keepdims=True)
            var = jnp.mean(h * h, axis=0, keepdims=True) - mean * mean
            out_ref[...] = _bn_relu_fc_softmax(h, mean, var, g_ref, be_ref,
                                               w2_ref, b2_ref)

        vmem = pl.BlockSpec(memory_space=pltpu.MemorySpace.VMEM)
        return pl.pallas_call(
            fused_kernel,
            out_shape=jax.ShapeDtypeStruct((B, NUM_CLASSES), jnp.float32),
            in_specs=[vmem] * 6,
            out_specs=vmem,
            compiler_params=pltpu.CompilerParams(vmem_limit_bytes=vmem_limit),
        )(x, w1b, gr, br, w2p, b2p)

    # ---------------- tiled paths: pad B to a multiple of TB (mult of 16 for bf16) ----------------
    per_row_tile_bytes = 2 * x_row_bytes + 2 * H * 4 + H * 2   # x dbl-buf + live f32 h + bf16 h
    tb_cap = max(16, ((vmem_limit // 2) // per_row_tile_bytes) // 16 * 16)
    TB = min(_round_up(min(block_b, B), 16), tb_cap)
    B_pad = _round_up(B, TB)
    n_tiles = B_pad // TB
    if B_pad != B:
        x = jnp.pad(x, ((0, B_pad - B), (0, 0)))

    def _stat_sums(h):
        return (jnp.sum(h, axis=0, keepdims=True),
                jnp.sum(h * h, axis=0, keepdims=True))

    def _masked_stat_sums(h, i):
        # Only the last tile can contain zero-padded rows.
        rows = i * TB + jax.lax.broadcasted_iota(jnp.int32, (TB, 1), 0)
        hm = jnp.where(rows < B, h, 0.0)
        return _stat_sums(hm)

    # ---------------- medium batch: single call, VMEM-resident bf16 h ----------------
    h_scratch_bytes = n_tiles * TB * H * 2
    tile_buf_bytes = 2 * TB * x_row_bytes + 2 * TB * NUM_CLASSES * 4
    resident_ok = (h_scratch_bytes + tile_buf_bytes + weight_bytes
                   <= vmem_limit - (4 << 20))
    if max_resident_rows is not None:
        resident_ok = resident_ok and (B_pad <= max_resident_rows)

    if resident_ok:
        def resident_kernel(x_ref, w1_ref, g_ref, be_ref, w2_ref, b2_ref,
                            out_ref, h_vmem, sum_ref, ssq_ref):
            p = pl.program_id(0)   # phase: 0 = Linear1 + stats, 1 = BN/ReLU/FC/softmax
            i = pl.program_id(1)   # batch tile

            @pl.when(jnp.logical_and(p == 0, i == 0))
            def _():
                sum_ref[...] = jnp.zeros_like(sum_ref)
                ssq_ref[...] = jnp.zeros_like(ssq_ref)

            @pl.when(p == 0)
            def _():
                h = _linear1(x_ref, w1_ref)                 # (TB,256) f32
                h_vmem[i] = h.astype(jnp.bfloat16)          # stays in VMEM, no HBM trip
                if B_pad != B:
                    @pl.when(i == n_tiles - 1)
                    def _():
                        s, ss = _masked_stat_sums(h, i)
                        sum_ref[...] = sum_ref[...] + s
                        ssq_ref[...] = ssq_ref[...] + ss

                    @pl.when(i < n_tiles - 1)
                    def _():
                        s, ss = _stat_sums(h)
                        sum_ref[...] = sum_ref[...] + s
                        ssq_ref[...] = ssq_ref[...] + ss
                else:
                    s, ss = _stat_sums(h)
                    sum_ref[...] = sum_ref[...] + s
                    ssq_ref[...] = ssq_ref[...] + ss

            @pl.when(p == 1)
            def _():
                mean = sum_ref[...] * inv_b
                var = ssq_ref[...] * inv_b - mean * mean
                out_ref[...] = _bn_relu_fc_softmax(h_vmem[i], mean, var,
                                                   g_ref, be_ref, w2_ref, b2_ref)

        out = pl.pallas_call(
            resident_kernel,
            out_shape=jax.ShapeDtypeStruct((B_pad, NUM_CLASSES), jnp.float32),
            grid_spec=pltpu.PrefetchScalarGridSpec(
                num_scalar_prefetch=0,
                grid=(2, n_tiles),
                in_specs=[
                    # x streamed in phase 0 only; phase 1 pins the last tile (no re-fetch)
                    pl.BlockSpec((TB, K), lambda p, i: (i + p * (n_tiles - 1 - i), 0)),
                    pl.BlockSpec((K, H), lambda p, i: (0, 0)),       # w1 resident
                    pl.BlockSpec((1, H), lambda p, i: (0, 0)),       # gamma
                    pl.BlockSpec((1, H), lambda p, i: (0, 0)),       # beta
                    pl.BlockSpec((H, C_PAD), lambda p, i: (0, 0)),   # w2 (padded)
                    pl.BlockSpec((1, C_PAD), lambda p, i: (0, 0)),   # b2 (padded)
                ],
                out_specs=pl.BlockSpec((TB, NUM_CLASSES),
                                       lambda p, i: (i * p, 0)),     # written in phase 1
                scratch_shapes=[
                    pltpu.VMEM((n_tiles, TB, H), jnp.bfloat16),      # resident h
                    pltpu.VMEM((1, H), jnp.float32),                 # sum(h)
                    pltpu.VMEM((1, H), jnp.float32),                 # sum(h^2)
                ]),
            compiler_params=pltpu.CompilerParams(
                dimension_semantics=("arbitrary", "arbitrary"),
                vmem_limit_bytes=vmem_limit),
        )(x, w1b, gr, br, w2p, b2p)
        return out[:B] if B_pad != B else out

    # ---------------- very large batch: two-pass fallback (bf16 h via HBM) ----------------
    def pass1_kernel(x_ref, w1_ref, h_ref, sum_ref, ssq_ref):
        i = pl.program_id(0)

        @pl.when(i == 0)
        def _():
            sum_ref[...] = jnp.zeros_like(sum_ref)
            ssq_ref[...] = jnp.zeros_like(ssq_ref)

        h = _linear1(x_ref, w1_ref)                     # (TB,256) f32
        h_ref[...] = h.astype(jnp.bfloat16)             # bf16 intermediate -> HBM
        if B_pad != B:
            @pl.when(i == n_tiles - 1)
            def _():
                s, ss = _masked_stat_sums(h, i)
                sum_ref[...] = sum_ref[...] + s
                ssq_ref[...] = ssq_ref[...] + ss

            @pl.when(i < n_tiles - 1)
            def _():
                s, ss = _stat_sums(h)
                sum_ref[...] = sum_ref[...] + s
                ssq_ref[...] = ssq_ref[...] + ss
        else:
            s, ss = _stat_sums(h)
            sum_ref[...] = sum_ref[...] + s
            ssq_ref[...] = ssq_ref[...] + ss

    h_all, h_sum, h_ssq = pl.pallas_call(
        pass1_kernel,
        out_shape=(jax.ShapeDtypeStruct((B_pad, H), jnp.bfloat16),
                   jax.ShapeDtypeStruct((1, H), jnp.float32),
                   jax.ShapeDtypeStruct((1, H), jnp.float32)),
        grid_spec=pltpu.PrefetchScalarGridSpec(
            num_scalar_prefetch=0,
            grid=(n_tiles,),
            in_specs=[
                pl.BlockSpec((TB, K), lambda i: (i, 0)),     # x tile streams
                pl.BlockSpec((K, H), lambda i: (0, 0)),      # w1 resident
            ],
            out_specs=(
                pl.BlockSpec((TB, H), lambda i: (i, 0)),     # bf16 h tile streams out
                pl.BlockSpec((1, H), lambda i: (0, 0)),      # sum accumulator
                pl.BlockSpec((1, H), lambda i: (0, 0)),      # sumsq accumulator
            )),
        compiler_params=pltpu.CompilerParams(
            dimension_semantics=("arbitrary",),
            vmem_limit_bytes=vmem_limit),
    )(x, w1b)

    def pass2_kernel(h_ref, sum_ref, ssq_ref, g_ref, be_ref, w2_ref, b2_ref, out_ref):
        mean = sum_ref[...] * inv_b
        var = ssq_ref[...] * inv_b - mean * mean
        out_ref[...] = _bn_relu_fc_softmax(h_ref[...], mean, var,
                                           g_ref, be_ref, w2_ref, b2_ref)

    out = pl.pallas_call(
        pass2_kernel,
        out_shape=jax.ShapeDtypeStruct((B_pad, NUM_CLASSES), jnp.float32),
        grid_spec=pltpu.PrefetchScalarGridSpec(
            num_scalar_prefetch=0,
            grid=(n_tiles,),
            in_specs=[
                pl.BlockSpec((TB, H), lambda i: (i, 0)),     # bf16 h tile streams
                pl.BlockSpec((1, H), lambda i: (0, 0)),
                pl.BlockSpec((1, H), lambda i: (0, 0)),
                pl.BlockSpec((1, H), lambda i: (0, 0)),
                pl.BlockSpec((1, H), lambda i: (0, 0)),
                pl.BlockSpec((H, C_PAD), lambda i: (0, 0)),
                pl.BlockSpec((1, C_PAD), lambda i: (0, 0)),
            ],
            out_specs=pl.BlockSpec((TB, NUM_CLASSES), lambda i: (i, 0))),
        compiler_params=pltpu.CompilerParams(
            dimension_semantics=("parallel",),               # v7x megacore
            vmem_limit_bytes=vmem_limit),
    )(h_all, h_sum, h_ssq, gr, br, w2p, b2p)
    return out[:B] if B_pad != B else out


# ---------------- reference / test ----------------

def init_params(key):
    # PyTorch nn.Linear default init: U(-1/sqrt(fan_in), 1/sqrt(fan_in))
    k1, k2, k3, k4 = jax.random.split(key, 4)
    lim1 = 1.0 / jnp.sqrt(512.0)
    w1 = jax.random.uniform(k1, (512, 256), jnp.float32, -lim1, lim1)  # (in,out)
    b1 = jax.random.uniform(k2, (1, 256), jnp.float32, -lim1, lim1)
    lim2 = 1.0 / jnp.sqrt(256.0)
    w2 = jax.random.uniform(k3, (256, 10), jnp.float32, -lim2, lim2)   # (in,out)
    b2 = jax.random.uniform(k4, (1, 10), jnp.float32, -lim2, lim2)
    gamma = jnp.ones((1, 256), jnp.float32)   # BatchNorm1d affine defaults
    beta = jnp.zeros((1, 256), jnp.float32)
    return w1, b1, gamma, beta, w2, b2


def reference_forward(x, w1, b1, gamma, beta, w2, b2):
    h = x @ w1 + b1
    mean = jnp.mean(h, axis=0, keepdims=True)
    var = jnp.mean((h - mean) ** 2, axis=0, keepdims=True)
    h = (h - mean) / jnp.sqrt(var + BN_EPS)
    h = h * gamma + beta
    h = jnp.maximum(h, 0.0)
    logits = h @ w2 + b2
    return jax.nn.softmax(logits, axis=1)


def _check(out, ref, B):
    assert out.shape == (B, NUM_CLASSES)
    assert jnp.allclose(jnp.sum(out, axis=1), 1.0, atol=5e-3)
    err = float(jnp.max(jnp.abs(out - ref)))
    assert jnp.allclose(out, ref, atol=1e-2, rtol=1e-2), err


if __name__ == "__main__":
    key = jax.random.PRNGKey(0)
    kx, kp = jax.random.split(key)
    params = init_params(kp)

    # 1) small-batch fully fused path
    B1 = 12
    x1 = jax.random.normal(kx, (B1, 512), jnp.float32)
    out1 = jax.block_until_ready(decoder_forward(x1, *params))
    _check(out1, reference_forward(x1, *params), B1)

    # 2) tiled single-call path with VMEM-resident bf16 h (tiny tile -> real grid,
    #    exercises the last-tile row masking too)
    B2 = 40
    x2 = jax.random.normal(kx, (B2, 512), jnp.float32)
    out2 = jax.block_until_ready(decoder_forward(x2, *params, block_b=16))
    _check(out2, reference_forward(x2, *params), B2)

    # 3) two-pass HBM fallback (force it by disallowing the resident-h scratch)
    out3 = jax.block_until_ready(
        decoder_forward(x2, *params, block_b=16, max_resident_rows=0))
    _check(out3, reference_forward(x2, *params), B2)

    print("KERNEL_OK")
</pallas_src>

<mosaic_0001>
module attributes {stable_mosaic.version = 11 : i64} {
  func.func @fused_kernel(%arg0: memref<12x512xf32, #tpu.memory_space<vmem>>, %arg1: memref<512x256xbf16, #tpu.memory_space<vmem>>, %arg2: memref<1x256xf32, #tpu.memory_space<vmem>>, %arg3: memref<1x256xf32, #tpu.memory_space<vmem>>, %arg4: memref<256x128xbf16, #tpu.memory_space<vmem>>, %arg5: memref<1x128xf32, #tpu.memory_space<vmem>>, %arg6: memref<12x10xf32, #tpu.memory_space<vmem>>) attributes {dimension_semantics = [], scalar_prefetch = 0 : i64, scratch_operands = 0 : i64, tpu.core_type = #tpu.core_type<tc>} {
    %c0 = arith.constant 0 : index
    %c0_0 = arith.constant 0 : index
    %0 = vector.load %arg0[%c0, %c0_0] : memref<12x512xf32, #tpu.memory_space<vmem>>, vector<12x512xf32>
    %1 = arith.truncf %0 : vector<12x512xf32> to vector<12x512xbf16>
    %c0_1 = arith.constant 0 : index
    %c0_2 = arith.constant 0 : index
    %2 = vector.load %arg1[%c0_1, %c0_2] : memref<512x256xbf16, #tpu.memory_space<vmem>>, vector<512x256xbf16>
    %cst = arith.constant dense<0.000000e+00> : vector<12x256xf32>
    %3 = tpu.matmul %1, %2, %cst {dimension_numbers = #tpu.dot_dimension_numbers<[1], [0], [0], [1], [0, 0, 1, 1], [], []>} : vector<12x512xbf16>, vector<512x256xbf16>, vector<12x256xf32> -> vector<12x256xf32>
    %cst_3 = arith.constant dense<0.000000e+00> : vector<256xf32>
    %4 = vector.multi_reduction <add>, %3, %cst_3 [0] : vector<12x256xf32> to vector<256xf32>
    %5 = vector.shape_cast %4 : vector<256xf32> to vector<1x256xf32>
    %cst_4 = arith.constant 1.200000e+01 : f32
    %6 = vector.broadcast %cst_4 : f32 to vector<1x256xf32>
    %7 = arith.divf %5, %6 : vector<1x256xf32>
    %8 = arith.mulf %3, %3 : vector<12x256xf32>
    %cst_5 = arith.constant dense<0.000000e+00> : vector<256xf32>
    %9 = vector.multi_reduction <add>, %8, %cst_5 [0] : vector<12x256xf32> to vector<256xf32>
    %10 = vector.shape_cast %9 : vector<256xf32> to vector<1x256xf32>
    %cst_6 = arith.constant 1.200000e+01 : f32
    %11 = vector.broadcast %cst_6 : f32 to vector<1x256xf32>
    %12 = arith.divf %10, %11 : vector<1x256xf32>
    %13 = arith.mulf %7, %7 : vector<1x256xf32>
    %14 = arith.subf %12, %13 : vector<1x256xf32>
    %c0_7 = arith.constant 0 : index
    %c0_8 = arith.constant 0 : index
    %15 = vector.load %arg2[%c0_7, %c0_8] : memref<1x256xf32, #tpu.memory_space<vmem>>, vector<1x256xf32>
    %cst_9 = arith.constant 0.000000e+00 : f32
    %16 = vector.broadcast %cst_9 : f32 to vector<1x256xf32>
    %17 = arith.maximumf %14, %16 : vector<1x256xf32>
    %cst_10 = arith.constant 9.99999974E-6 : f32
    %18 = vector.broadcast %cst_10 : f32 to vector<1x256xf32>
    %19 = arith.addf %17, %18 : vector<1x256xf32>
    %20 = math.rsqrt %19 : vector<1x256xf32>
    %21 = arith.mulf %15, %20 : vector<1x256xf32>
    %c0_11 = arith.constant 0 : index
    %c0_12 = arith.constant 0 : index
    %22 = vector.load %arg3[%c0_11, %c0_12] : memref<1x256xf32, #tpu.memory_space<vmem>>, vector<1x256xf32>
    %23 = arith.mulf %7, %21 : vector<1x256xf32>
    %24 = arith.subf %22, %23 : vector<1x256xf32>
    %25 = vector.broadcast %21 : vector<1x256xf32> to vector<12x256xf32>
    %26 = arith.mulf %3, %25 : vector<12x256xf32>
    %27 = vector.broadcast %24 : vector<1x256xf32> to vector<12x256xf32>
    %28 = arith.addf %26, %27 : vector<12x256xf32>
    %cst_13 = arith.constant 0.000000e+00 : f32
    %29 = vector.broadcast %cst_13 : f32 to vector<12x256xf32>
    %30 = arith.maximumf %28, %29 : vector<12x256xf32>
    %31 = arith.truncf %30 : vector<12x256xf32> to vector<12x256xbf16>
    %c0_14 = arith.constant 0 : index
    %c0_15 = arith.constant 0 : index
    %32 = vector.load %arg4[%c0_14, %c0_15] : memref<256x128xbf16, #tpu.memory_space<vmem>>, vector<256x128xbf16>
    %cst_16 = arith.constant dense<0.000000e+00> : vector<12x128xf32>
    %33 = tpu.matmul %31, %32, %cst_16 {dimension_numbers = #tpu.dot_dimension_numbers<[1], [0], [0], [1], [0, 0, 1, 1], [], []>} : vector<12x256xbf16>, vector<256x128xbf16>, vector<12x128xf32> -> vector<12x128xf32>
    %c0_17 = arith.constant 0 : index
    %c0_18 = arith.constant 0 : index
    %34 = vector.load %arg5[%c0_17, %c0_18] : memref<1x128xf32, #tpu.memory_space<vmem>>, vector<1x128xf32>
    %35 = vector.broadcast %34 : vector<1x128xf32> to vector<12x128xf32>
    %36 = arith.addf %33, %35 : vector<12x128xf32>
    %cst_19 = arith.constant dense<0xFF800000> : vector<12xf32>
    %37 = vector.multi_reduction <maximumf>, %36, %cst_19 [1] : vector<12x128xf32> to vector<12xf32>
    %38 = vector.shape_cast %37 : vector<12xf32> to vector<12x1xf32>
    %39 = vector.broadcast %38 : vector<12x1xf32> to vector<12x128xf32>
    %40 = arith.subf %36, %39 : vector<12x128xf32>
    %41 = math.exp %40 : vector<12x128xf32>
    %cst_20 = arith.constant dense<0.000000e+00> : vector<12xf32>
    %42 = vector.multi_reduction <add>, %41, %cst_20 [1] : vector<12x128xf32> to vector<12xf32>
    %43 = vector.shape_cast %42 : vector<12xf32> to vector<12x1xf32>
    %44 = tpu.reciprocal %43 {approx = true} : vector<12x1xf32> -> vector<12x1xf32>
    %45 = vector.broadcast %44 : vector<12x1xf32> to vector<12x128xf32>
    %46 = arith.mulf %41, %45 : vector<12x128xf32>
    %47 = vector.extract_strided_slice %46 {offsets = [0, 0], sizes = [12, 10], strides = [1, 1]} : vector<12x128xf32> to vector<12x10xf32>
    %c0_21 = arith.constant 0 : index
    %c0_22 = arith.constant 0 : index
    %48 = vector.load %arg6[%c0_21, %c0_22] : memref<12x10xf32, #tpu.memory_space<vmem>>, vector<12x10xf32>
    tpu.vector_store %arg6[%c0_21, %c0_22], %47 {strides = array<i32>} : memref<12x10xf32, #tpu.memory_space<vmem>>, vector<12x10xf32>,
    return
  }
}

</mosaic_0001>

<llo_original>
// kernel: tpu_custom_call.1
$region0: #{tpu_custom_call.1}
  #allocation0 [shape = 'u32[]', space=smem, size = 0x4, offset = 0x4, fixed_abs, tag = 'smem constant byte address 0x4 - core index']
  #allocation1 [shape = 'u32[144,128]{1,0:T(1,128)}', space=vmem, size = 0x12000, scoped, tag = 'internal scratch']
  %s0 = inlined_call_operand.hbm [shape: f32[12,512], index: 0, kind: input, shape index: {}]
  %s1 = inlined_call_operand.hbm [shape: bf16[512,256], index: 1, kind: input, shape index: {}]
  %s2 = inlined_call_operand.vmem [shape: f32[1,256], index: 2, kind: input, shape index: {}]
  %s3 = inlined_call_operand.vmem [shape: f32[1,256], index: 3, kind: input, shape index: {}]
  %s4 = inlined_call_operand.hbm [shape: bf16[256,128], index: 4, kind: input, shape index: {}]
  %s5 = inlined_call_operand.vmem [shape: f32[1,128], index: 5, kind: input, shape index: {}]
  %s6 = inlined_call_operand.hbm [shape: f32[12,10], index: 6, kind: output, shape index: {}]
  %s7 = sld [smem:[#allocation0]]
  $region46: #{tpu_custom_call.1} parent=0
    _
  %s9 = ssub.s32 1, %s7
  %s10 = scalar_select 0, %s9, %s7
  $region1: #{tpu_custom_call.1} parent=0
    #allocation2 [shape = 'u8[32768]{0}', space=vmem, size = 0x8000, scoped, tag = 'input window, operand 0, single buffered']
    #allocation3 [shape = 's32[1]{0}', space=sflag, size = 0x4, scoped, tag = 'scoped memory for tpu_custom_call.1']
    #allocation4 [shape = 's32[1]{0}', space=sflag, size = 0x4, scoped, tag = 'scoped memory for tpu_custom_call.1']
    #allocation5 [shape = 'u8[262144]{0}', space=vmem, size = 0x40000, scoped, tag = 'input window, operand 1, single buffered']
    #allocation6 [shape = 's32[1]{0}', space=sflag, size = 0x4, scoped, tag = 'scoped memory for tpu_custom_call.1']
    #allocation7 [shape = 'u8[65536]{0}', space=vmem, size = 0x10000, scoped, tag = 'input window, operand 4, single buffered']
    #allocation8 [shape = 'u8[8192]{0}', space=vmem, size = 0x2000, scoped, tag = 'output window, operand 0, single buffered']
    %11 = vsyncpa [#allocation3], 0
    %12 = vsyncpa [#allocation6], 0
    %13 = vsyncpa [#allocation4], 0
    // Predicated region
    $region2: #{tpu_custom_call.1} parent=1 // pred_check
      _
    $region3: #{tpu_custom_call.1} parent=1 // pred_check_branch
      %15 = sbr.rel (0) target = $region5
    $region4: #{tpu_custom_call.1} parent=1 // pred_region
      %s17 = ssub.s32 1024, 1024
      %18 = vsyncadd [#allocation3], %s17
      %s19 = sshll.u32 [#allocation2], 4
      %s20 = int_to_ptr.vmem [resolvable:$true] %s19
      %25 = dma.hbm_to_vmem [thread:$0]  %s0, 1024, %s20, [#allocation3], 512, 512, 32
    $region5: #{tpu_custom_call.1} parent=1 // pred_fallthru
      _
    // Predicated region
    $region6: #{tpu_custom_call.1} parent=1 // pred_check
      _
    $region7: #{tpu_custom_call.1} parent=1 // pred_check_branch
      %27 = sbr.rel (0) target = $region9
    $region8: #{tpu_custom_call.1} parent=1 // pred_region
      %s29 = ssub.s32 8192, 8192
      %30 = vsyncadd [#allocation6], %s29
      %s31 = sshll.u32 [#allocation5], 4
      %s32 = int_to_ptr.vmem [resolvable:$true] %s31
      %37 = dma.hbm_to_vmem [thread:$0]  %s1, 8192, %s32, [#allocation6], 128, 128, 8
    $region9: #{tpu_custom_call.1} parent=1 // pred_fallthru
      _
    // Predicated region
    $region10: #{tpu_custom_call.1} parent=1 // pred_check
      _
    $region11: #{tpu_custom_call.1} parent=1 // pred_check_branch
      %39 = sbr.rel (0) target = $region13
    $region12: #{tpu_custom_call.1} parent=1 // pred_region
      _
    $region13: #{tpu_custom_call.1} parent=1 // pred_fallthru
      _
    // Predicated region
    $region14: #{tpu_custom_call.1} parent=1 // pred_check
      _
    $region15: #{tpu_custom_call.1} parent=1 // pred_check_branch
      %41 = sbr.rel (0) target = $region17
    $region16: #{tpu_custom_call.1} parent=1 // pred_region
      _
    $region17: #{tpu_custom_call.1} parent=1 // pred_fallthru
      _
    // Predicated region
    $region18: #{tpu_custom_call.1} parent=1 // pred_check
      _
    $region19: #{tpu_custom_call.1} parent=1 // pred_check_branch
      %43 = sbr.rel (0) target = $region21
    $region20: #{tpu_custom_call.1} parent=1 // pred_region
      %s45 = ssub.s32 2048, 2048
      %46 = vsyncadd [#allocation6], %s45
      %s47 = sshll.u32 [#allocation7], 4
      %s48 = int_to_ptr.vmem [resolvable:$true] %s47
      %53 = dma.hbm_to_vmem [thread:$0]  %s4, 2048, %s48, [#allocation6], 64, 64, 4
    $region21: #{tpu_custom_call.1} parent=1 // pred_fallthru
      _
    // Predicated region
    $region22: #{tpu_custom_call.1} parent=1 // pred_check
      _
    $region23: #{tpu_custom_call.1} parent=1 // pred_check_branch
      %55 = sbr.rel (0) target = $region25
    $region24: #{tpu_custom_call.1} parent=1 // pred_region
      _
    $region25: #{tpu_custom_call.1} parent=1 // pred_fallthru
      _
    // Predicated region
    $region26: #{tpu_custom_call.1} parent=1 // pred_check
      _
    $region27: #{tpu_custom_call.1} parent=1 // pred_check_branch
      %57 = sbr.rel (0) target = $region29
    $region28: #{tpu_custom_call.1} parent=1 // pred_region
      %58 = dma.done [#allocation3], 1024
    $region29: #{tpu_custom_call.1} parent=1 // pred_fallthru
      _
    // Predicated region
    $region30: #{tpu_custom_call.1} parent=1 // pred_check
      _
    $region31: #{tpu_custom_call.1} parent=1 // pred_check_branch
      %60 = sbr.rel (0) target = $region33
    $region32: #{tpu_custom_call.1} parent=1 // pred_region
      %61 = dma.done [#allocation6], 8192
    $region33: #{tpu_custom_call.1} parent=1 // pred_fallthru
      _
    // Predicated region
    $region34: #{tpu_custom_call.1} parent=1 // pred_check
      _
    $region35: #{tpu_custom_call.1} parent=1 // pred_check_branch
      %63 = sbr.rel (0) target = $region37
    $region36: #{tpu_custom_call.1} parent=1 // pred_region
      %64 = dma.done [#allocation6], 2048
    $region37: #{tpu_custom_call.1} parent=1 // pred_fallthru
      _
    %v66 = vld [vmem:[#allocation2] sm:$0xff]
    %v67 = vld [vmem:[#allocation2 + $0x8] sm:$0xff]
    %v68 = vld [vmem:[#allocation2 + $0x10] sm:$0xff]
    %v69 = vld [vmem:[#allocation2 + $0x18] sm:$0xff]
    %v70 = vld [vmem:[#allocation2 + $0x20] sm:$0xf]
    %v71 = vld [vmem:[#allocation2 + $0x28] sm:$0xf]
    %v72 = vld [vmem:[#allocation2 + $0x30] sm:$0xf]
    %v73 = vld [vmem:[#allocation2 + $0x38] sm:$0xf]
    %v74 = vpack.c.bf16 %v70, %v66
    %v75 = vpack.c.bf16 %v71, %v67
    %v76 = vpack.c.bf16 %v72, %v68
    %v77 = vpack.c.bf16 %v73, %v69
    %v78 = vld [vmem:[#allocation5] sm:$0xff]
    %v79 = vld [vmem:[#allocation5 + $0x8] sm:$0xff]
    %v80 = vld [vmem:[#allocation5 + $0x10] sm:$0xff]
    %v81 = vld [vmem:[#allocation5 + $0x18] sm:$0xff]
    %v82 = vld [vmem:[#allocation5 + $0x20] sm:$0xff]
    %v83 = vld [vmem:[#allocation5 + $0x28] sm:$0xff]
    %v84 = vld [vmem:[#allocation5 + $0x30] sm:$0xff]
    %v85 = vld [vmem:[#allocation5 + $0x38] sm:$0xff]
    %v86 = vld [vmem:[#allocation5 + $0x40] sm:$0xff]
    %v87 = vld [vmem:[#allocation5 + $0x48] sm:$0xff]
    %v88 = vld [vmem:[#allocation5 + $0x50] sm:$0xff]
    %v89 = vld [vmem:[#allocation5 + $0x58] sm:$0xff]
    %v90 = vld [vmem:[#allocation5 + $0x60] sm:$0xff]
    %v91 = vld [vmem:[#allocation5 + $0x68] sm:$0xff]
    %v92 = vld [vmem:[#allocation5 + $0x70] sm:$0xff]
    %v93 = vld [vmem:[#allocation5 + $0x78] sm:$0xff]
    %v94 = vld [vmem:[#allocation5 + $0x80] sm:$0xff]
    %v95 = vld [vmem:[#allocation5 + $0x88] sm:$0xff]
    %v96 = vld [vmem:[#allocation5 + $0x90] sm:$0xff]
    %v97 = vld [vmem:[#allocation5 + $0x98] sm:$0xff]
    %v98 = vld [vmem:[#allocation5 + $0xa0] sm:$0xff]
    %v99 = vld [vmem:[#allocation5 + $0xa8] sm:$0xff]
    %v100 = vld [vmem:[#allocation5 + $0xb0] sm:$0xff]
    %v101 = vld [vmem:[#allocation5 + $0xb8] sm:$0xff]
    %v102 = vld [vmem:[#allocation5 + $0xc0] sm:$0xff]
    %v103 = vld [vmem:[#allocation5 + $0xc8] sm:$0xff]
    %v104 = vld [vmem:[#allocation5 + $0xd0] sm:$0xff]
    %v105 = vld [vmem:[#allocation5 + $0xd8] sm:$0xff]
    %v106 = vld [vmem:[#allocation5 + $0xe0] sm:$0xff]
    %v107 = vld [vmem:[#allocation5 + $0xe8] sm:$0xff]
    %v108 = vld [vmem:[#allocation5 + $0xf0] sm:$0xff]
    %v109 = vld [vmem:[#allocation5 + $0xf8] sm:$0xff]
    %v110 = vld [vmem:[#allocation5 + $0x100] sm:$0xff]
    %v111 = vld [vmem:[#allocation5 + $0x108] sm:$0xff]
    %v112 = vld [vmem:[#allocation5 + $0x110] sm:$0xff]
    %v113 = vld [vmem:[#allocation5 + $0x118] sm:$0xff]
    %v114 = vld [vmem:[#allocation5 + $0x120] sm:$0xff]
    %v115 = vld [vmem:[#allocation5 + $0x128] sm:$0xff]
    %v116 = vld [vmem:[#allocation5 + $0x130] sm:$0xff]
    %v117 = vld [vmem:[#allocation5 + $0x138] sm:$0xff]
    %v118 = vld [vmem:[#allocation5 + $0x140] sm:$0xff]
    %v119 = vld [vmem:[#allocation5 + $0x148] sm:$0xff]
    %v120 = vld [vmem:[#allocation5 + $0x150] sm:$0xff]
    %v121 = vld [vmem:[#allocation5 + $0x158] sm:$0xff]
    %v122 = vld [vmem:[#allocation5 + $0x160] sm:$0xff]
    %v123 = vld [vmem:[#allocation5 + $0x168] sm:$0xff]
    %v124 = vld [vmem:[#allocation5 + $0x170] sm:$0xff]
    %v125 = vld [vmem:[#allocation5 + $0x178] sm:$0xff]
    %v126 = vld [vmem:[#allocation5 + $0x180] sm:$0xff]
    %v127 = vld [vmem:[#allocation5 + $0x188] sm:$0xff]
    %v128 = vld [vmem:[#allocation5 + $0x190] sm:$0xff]
    %v129 = vld [vmem:[#allocation5 + $0x198] sm:$0xff]
    %v130 = vld [vmem:[#allocation5 + $0x1a0] sm:$0xff]
    %v131 = vld [vmem:[#allocation5 + $0x1a8] sm:$0xff]
    %v132 = vld [vmem:[#allocation5 + $0x1b0] sm:$0xff]
    %v133 = vld [vmem:[#allocation5 + $0x1b8] sm:$0xff]
    %v134 = vld [vmem:[#allocation5 + $0x1c0] sm:$0xff]
    %v135 = vld [vmem:[#allocation5 + $0x1c8] sm:$0xff]
    %v136 = vld [vmem:[#allocation5 + $0x1d0] sm:$0xff]
    %v137 = vld [vmem:[#allocation5 + $0x1d8] sm:$0xff]
    %v138 = vld [vmem:[#allocation5 + $0x1e0] sm:$0xff]
    %v139 = vld [vmem:[#allocation5 + $0x1e8] sm:$0xff]
    %v140 = vld [vmem:[#allocation5 + $0x1f0] sm:$0xff]
    %v141 = vld [vmem:[#allocation5 + $0x1f8] sm:$0xff]
    %v206 = vunpack.c.l.b16 %v78
    %v207 = vunpack.c.h.b16 %v78
    %v208 = vunpack.c.l.b16 %v79
    %v209 = vunpack.c.h.b16 %v79
    %v210 = vunpack.c.l.b16 %v80
    %v211 = vunpack.c.h.b16 %v80
    %v212 = vunpack.c.l.b16 %v81
    %v213 = vunpack.c.h.b16 %v81
    %v214 = vunpack.c.l.b16 %v82
    %v215 = vunpack.c.h.b16 %v82
    %v216 = vunpack.c.l.b16 %v83
    %v217 = vunpack.c.h.b16 %v83
    %v218 = vunpack.c.l.b16 %v84
    %v219 = vunpack.c.h.b16 %v84
    %v220 = vunpack.c.l.b16 %v85
    %v221 = vunpack.c.h.b16 %v85
    %v222 = vunpack.c.l.b16 %v86
    %v223 = vunpack.c.h.b16 %v86
    %v224 = vunpack.c.l.b16 %v87
    %v225 = vunpack.c.h.b16 %v87
    %v226 = vunpack.c.l.b16 %v88
    %v227 = vunpack.c.h.b16 %v88
    %v228 = vunpack.c.l.b16 %v89
    %v229 = vunpack.c.h.b16 %v89
    %v230 = vunpack.c.l.b16 %v90
    %v231 = vunpack.c.h.b16 %v90
    %v232 = vunpack.c.l.b16 %v91
    %v233 = vunpack.c.h.b16 %v91
    %v234 = vunpack.c.l.b16 %v92
    %v235 = vunpack.c.h.b16 %v92
    %v236 = vunpack.c.l.b16 %v93
    %v237 = vunpack.c.h.b16 %v93
    %v238 = vunpack.c.l.b16 %v94
    %v239 = vunpack.c.h.b16 %v94
    %v240 = vunpack.c.l.b16 %v95
    %v241 = vunpack.c.h.b16 %v95
    %v242 = vunpack.c.l.b16 %v96
    %v243 = vunpack.c.h.b16 %v96
    %v244 = vunpack.c.l.b16 %v97
    %v245 = vunpack.c.h.b16 %v97
    %v246 = vunpack.c.l.b16 %v98
    %v247 = vunpack.c.h.b16 %v98
    %v248 = vunpack.c.l.b16 %v99
    %v249 = vunpack.c.h.b16 %v99
    %v250 = vunpack.c.l.b16 %v100
    %v251 = vunpack.c.h.b16 %v100
    %v252 = vunpack.c.l.b16 %v101
    %v253 = vunpack.c.h.b16 %v101
    %v254 = vunpack.c.l.b16 %v102
    %v255 = vunpack.c.h.b16 %v102
    %v256 = vunpack.c.l.b16 %v103
    %v257 = vunpack.c.h.b16 %v103
    %v258 = vunpack.c.l.b16 %v104
    %v259 = vunpack.c.h.b16 %v104
    %v260 = vunpack.c.l.b16 %v105
    %v261 = vunpack.c.h.b16 %v105
    %v262 = vunpack.c.l.b16 %v106
    %v263 = vunpack.c.h.b16 %v106
    %v264 = vunpack.c.l.b16 %v107
    %v265 = vunpack.c.h.b16 %v107
    %v266 = vunpack.c.l.b16 %v108
    %v267 = vunpack.c.h.b16 %v108
    %v268 = vunpack.c.l.b16 %v109
    %v269 = vunpack.c.h.b16 %v109
    %v270 = vunpack.c.l.b16 %v110
    %v271 = vunpack.c.h.b16 %v110
    %v272 = vunpack.c.l.b16 %v111
    %v273 = vunpack.c.h.b16 %v111
    %v274 = vunpack.c.l.b16 %v112
    %v275 = vunpack.c.h.b16 %v112
    %v276 = vunpack.c.l.b16 %v113
    %v277 = vunpack.c.h.b16 %v113
    %v278 = vunpack.c.l.b16 %v114
    %v279 = vunpack.c.h.b16 %v114
    %v280 = vunpack.c.l.b16 %v115
    %v281 = vunpack.c.h.b16 %v115
    %v282 = vunpack.c.l.b16 %v116
    %v283 = vunpack.c.h.b16 %v116
    %v284 = vunpack.c.l.b16 %v117
    %v285 = vunpack.c.h.b16 %v117
    %v286 = vunpack.c.l.b16 %v118
    %v287 = vunpack.c.h.b16 %v118
    %v288 = vunpack.c.l.b16 %v119
    %v289 = vunpack.c.h.b16 %v119
    %v290 = vunpack.c.l.b16 %v120
    %v291 = vunpack.c.h.b16 %v120
    %v292 = vunpack.c.l.b16 %v121
    %v293 = vunpack.c.h.b16 %v121
    %v294 = vunpack.c.l.b16 %v122
    %v295 = vunpack.c.h.b16 %v122
    %v296 = vunpack.c.l.b16 %v123
    %v297 = vunpack.c.h.b16 %v123
    %v298 = vunpack.c.l.b16 %v124
    %v299 = vunpack.c.h.b16 %v124
    %v300 = vunpack.c.l.b16 %v125
    %v301 = vunpack.c.h.b16 %v125
    %v302 = vunpack.c.l.b16 %v126
    %v303 = vunpack.c.h.b16 %v126
    %v304 = vunpack.c.l.b16 %v127
    %v305 = vunpack.c.h.b16 %v127
    %v306 = vunpack.c.l.b16 %v128
    %v307 = vunpack.c.h.b16 %v128
    %v308 = vunpack.c.l.b16 %v129
    %v309 = vunpack.c.h.b16 %v129
    %v310 = vunpack.c.l.b16 %v130
    %v311 = vunpack.c.h.b16 %v130
    %v312 = vunpack.c.l.b16 %v131
    %v313 = vunpack.c.h.b16 %v131
    %v314 = vunpack.c.l.b16 %v132
    %v315 = vunpack.c.h.b16 %v132
    %v316 = vunpack.c.l.b16 %v133
    %v317 = vunpack.c.h.b16 %v133
    %v318 = vunpack.c.l.b16 %v134
    %v319 = vunpack.c.h.b16 %v134
    %v320 = vunpack.c.l.b16 %v135
    %v321 = vunpack.c.h.b16 %v135
    %v322 = vunpack.c.l.b16 %v136
    %v323 = vunpack.c.h.b16 %v136
    %v324 = vunpack.c.l.b16 %v137
    %v325 = vunpack.c.h.b16 %v137
    %v326 = vunpack.c.l.b16 %v138
    %v327 = vunpack.c.h.b16 %v138
    %v328 = vunpack.c.l.b16 %v139
    %v329 = vunpack.c.h.b16 %v139
    %v330 = vunpack.c.l.b16 %v140
    %v331 = vunpack.c.h.b16 %v140
    %v332 = vunpack.c.l.b16 %v141
    %v333 = vunpack.c.h.b16 %v141
    %v334 = vpack.c.b16 %v208, %v206
    %v335 = vpack.c.b16 %v209, %v207
    %v336 = vpack.c.b16 %v212, %v210
    %v337 = vpack.c.b16 %v213, %v211
    %v338 = vpack.c.b16 %v216, %v214
    %v339 = vpack.c.b16 %v217, %v215
    %v340 = vpack.c.b16 %v220, %v218
    %v341 = vpack.c.b16 %v221, %v219
    %v342 = vpack.c.b16 %v224, %v222
    %v343 = vpack.c.b16 %v225, %v223
    %v344 = vpack.c.b16 %v228, %v226
    %v345 = vpack.c.b16 %v229, %v227
    %v346 = vpack.c.b16 %v232, %v230
    %v347 = vpack.c.b16 %v233, %v231
    %v348 = vpack.c.b16 %v236, %v234
    %v349 = vpack.c.b16 %v237, %v235
    %v350 = vpack.c.b16 %v240, %v238
    %v351 = vpack.c.b16 %v241, %v239
    %v352 = vpack.c.b16 %v244, %v242
    %v353 = vpack.c.b16 %v245, %v243
    %v354 = vpack.c.b16 %v248, %v246
    %v355 = vpack.c.b16 %v249, %v247
    %v356 = vpack.c.b16 %v252, %v250
    %v357 = vpack.c.b16 %v253, %v251
    %v358 = vpack.c.b16 %v256, %v254
    %v359 = vpack.c.b16 %v257, %v255
    %v360 = vpack.c.b16 %v260, %v258
    %v361 = vpack.c.b16 %v261, %v259
    %v362 = vpack.c.b16 %v264, %v262
    %v363 = vpack.c.b16 %v265, %v263
    %v364 = vpack.c.b16 %v268, %v266
    %v365 = vpack.c.b16 %v269, %v267
    %v366 = vpack.c.b16 %v272, %v270
    %v367 = vpack.c.b16 %v273, %v271
    %v368 = vpack.c.b16 %v276, %v274
    %v369 = vpack.c.b16 %v277, %v275
    %v370 = vpack.c.b16 %v280, %v278
    %v371 = vpack.c.b16 %v281, %v279
    %v372 = vpack.c.b16 %v284, %v282
    %v373 = vpack.c.b16 %v285, %v283
    %v374 = vpack.c.b16 %v288, %v286
    %v375 = vpack.c.b16 %v289, %v287
    %v376 = vpack.c.b16 %v292, %v290
    %v377 = vpack.c.b16 %v293, %v291
    %v378 = vpack.c.b16 %v296, %v294
    %v379 = vpack.c.b16 %v297, %v295
    %v380 = vpack.c.b16 %v300, %v298
    %v381 = vpack.c.b16 %v301, %v299
    %v382 = vpack.c.b16 %v304, %v302
    %v383 = vpack.c.b16 %v305, %v303
    %v384 = vpack.c.b16 %v308, %v306
    %v385 = vpack.c.b16 %v309, %v307
    %v386 = vpack.c.b16 %v312, %v310
    %v387 = vpack.c.b16 %v313, %v311
    %v388 = vpack.c.b16 %v316, %v314
    %v389 = vpack.c.b16 %v317, %v315
    %v390 = vpack.c.b16 %v320, %v318
    %v391 = vpack.c.b16 %v321, %v319
    %v392 = vpack.c.b16 %v324, %v322
    %v393 = vpack.c.b16 %v325, %v323
    %v394 = vpack.c.b16 %v328, %v326
    %v395 = vpack.c.b16 %v329, %v327
    %v396 = vpack.c.b16 %v332, %v330
    %v397 = vpack.c.b16 %v333, %v331
    %462 = vmatprep.subr.bf16.mxu0 %v335
    %463 = vmatpush1.bf16.msra.mxu0 %v334
    %464 = vmatprep.subr.bf16.mxu0 %v337
    %465 = vmatpush1.bf16.msra.mxu0 %v336
    %466 = vmatprep.subr.bf16.mxu0 %v339
    %467 = vmatpush1.bf16.msra.mxu0 %v338
    %468 = vmatprep.subr.bf16.mxu0 %v341
    %469 = vmatpush1.bf16.msra.mxu0 %v340
    %470 = vmatprep.subr.bf16.mxu0 %v343
    %471 = vmatpush1.bf16.msra.mxu0 %v342
    %472 = vmatprep.subr.bf16.mxu0 %v345
    %473 = vmatpush1.bf16.msra.mxu0 %v344
    %474 = vmatprep.subr.bf16.mxu0 %v347
    %475 = vmatpush1.bf16.msra.mxu0 %v346
    %476 = vmatprep.subr.bf16.mxu0 %v349
    %477 = vmatpush1.bf16.msra.mxu0 %v348
    %478 = vmatprep.subr.bf16.mxu0 %v351
    %479 = vmatpush1.bf16.msra.mxu0 %v350
    %480 = vmatprep.subr.bf16.mxu0 %v353
    %481 = vmatpush1.bf16.msra.mxu0 %v352
    %482 = vmatprep.subr.bf16.mxu0 %v355
    %483 = vmatpush1.bf16.msra.mxu0 %v354
    %484 = vmatprep.subr.bf16.mxu0 %v357
    %485 = vmatpush1.bf16.msra.mxu0 %v356
    %486 = vmatprep.subr.bf16.mxu0 %v359
    %487 = vmatpush1.bf16.msra.mxu0 %v358
    %488 = vmatprep.subr.bf16.mxu0 %v361
    %489 = vmatpush1.bf16.msra.mxu0 %v360
    %490 = vmatprep.subr.bf16.mxu0 %v363
    %491 = vmatpush1.bf16.msra.mxu0 %v362
    %492 = vmatprep.subr.bf16.mxu0 %v365
    %493 = vmatpush1.bf16.msra.mxu0 %v364
    %494 = vmatprep.mubr.bf16.mxu0 %v75
    %495 = vmatmul.mubr.bf16.gmra.mrb[0].mxu0 %v74
    %v496 = vpop.f32.mrb[0].mxu0
    %v497 = vadd.f32 0.0, %v496
    %v498 = vpop.f32.mrb[0].mxu0
    %v499 = vadd.f32 0.0, %v498
    %v500 = vpop.f32.mrb[0].mxu0
    %v501 = vadd.f32 0.0, %v500
    %v502 = vpop.f32.mrb[0].mxu0
    %v503 = vadd.f32 0.0, %v502
    %504 = vdwg.mxu0
    %505 = vmatprep.subr.bf16.mxu0 %v367
    %506 = vmatpush1.bf16.msra.mxu0 %v366
    %507 = vmatprep.subr.bf16.mxu0 %v369
    %508 = vmatpush1.bf16.msra.mxu0 %v368
    %509 = vmatprep.subr.bf16.mxu0 %v371
    %510 = vmatpush1.bf16.msra.mxu0 %v370
    %511 = vmatprep.subr.bf16.mxu0 %v373
    %512 = vmatpush1.bf16.msra.mxu0 %v372
    %513 = vmatprep.subr.bf16.mxu0 %v375
    %514 = vmatpush1.bf16.msra.mxu0 %v374
    %515 = vmatprep.subr.bf16.mxu0 %v377
    %516 = vmatpush1.bf16.msra.mxu0 %v376
    %517 = vmatprep.subr.bf16.mxu0 %v379
    %518 = vmatpush1.bf16.msra.mxu0 %v378
    %519 = vmatprep.subr.bf16.mxu0 %v381
    %520 = vmatpush1.bf16.msra.mxu0 %v380
    %521 = vmatprep.subr.bf16.mxu0 %v383
    %522 = vmatpush1.bf16.msra.mxu0 %v382
    %523 = vmatprep.subr.bf16.mxu0 %v385
    %524 = vmatpush1.bf16.msra.mxu0 %v384
    %525 = vmatprep.subr.bf16.mxu0 %v387
    %526 = vmatpush1.bf16.msra.mxu0 %v386
    %527 = vmatprep.subr.bf16.mxu0 %v389
    %528 = vmatpush1.bf16.msra.mxu0 %v388
    %529 = vmatprep.subr.bf16.mxu0 %v391
    %530 = vmatpush1.bf16.msra.mxu0 %v390
    %531 = vmatprep.subr.bf16.mxu0 %v393
    %532 = vmatpush1.bf16.msra.mxu0 %v392
    %533 = vmatprep.subr.bf16.mxu0 %v395
    %534 = vmatpush1.bf16.msra.mxu0 %v394
    %535 = vmatprep.subr.bf16.mxu0 %v397
    %536 = vmatpush1.bf16.msra.mxu0 %v396
    %537 = vmatprep.mubr.bf16.mxu0 %v77
    %538 = vmatmul.mubr.bf16.gmra.mrb[0].mxu0 %v76
    %v539 = vpop.f32.mrb[0].mxu0
    %v540 = vadd.f32 %v497, %v539
    %v541 = vpop.f32.mrb[0].mxu0
    %v542 = vadd.f32 %v499, %v541
    %v543 = vpop.f32.mrb[0].mxu0
    %v544 = vadd.f32 %v501, %v543
    %v545 = vpop.f32.mrb[0].mxu0
    %v546 = vadd.f32 %v503, %v545
    %547 = vdwg.mxu0
    %vm548 = vcmask 1043456
    %v549 = vsel %vm548, %v544, 0.0
    %v550 = vadd.f32 %v540, %v549
    %v551 = vrot.slane %v550, 4
    %v552 = vadd.f32 %v550, %v551
    %v553 = vrot.slane %v552, 2
    %v554 = vadd.f32 %v552, %v553
    %v555 = vrot.slane %v554, 1
    %v556 = vadd.f32 %v554, %v555
    %v557 = vsel %vm548, %v546, 0.0
    %v558 = vadd.f32 %v542, %v557
    %v559 = vrot.slane %v558, 4
    %v560 = vadd.f32 %v558, %v559
    %v561 = vrot.slane %v560, 2
    %v562 = vadd.f32 %v560, %v561
    %v563 = vrot.slane %v562, 1
    %v564 = vadd.f32 %v562, %v563
    %v565 = vrcp.pop 12.0
    %v566 = vmul.f32 %v556, %v565
    %v567 = vmul.f32 %v564, %v565
    %v568 = vmul.f32 %v540, %v540
    %v569 = vmul.f32 %v542, %v542
    %v570 = vmul.f32 %v544, %v544
    %v571 = vmul.f32 %v546, %v546
    %v572 = vsel %vm548, %v570, 0.0
    %v573 = vadd.f32 %v568, %v572
    %v574 = vrot.slane %v573, 4
    %v575 = vadd.f32 %v573, %v574
    %v576 = vrot.slane %v575, 2
    %v577 = vadd.f32 %v575, %v576
    %v578 = vrot.slane %v577, 1
    %v579 = vadd.f32 %v577, %v578
    %v580 = vsel %vm548, %v571, 0.0
    %v581 = vadd.f32 %v569, %v580
    %v582 = vrot.slane %v581, 4
    %v583 = vadd.f32 %v581, %v582
    %v584 = vrot.slane %v583, 2
    %v585 = vadd.f32 %v583, %v584
    %v586 = vrot.slane %v585, 1
    %v587 = vadd.f32 %v585, %v586
    %v588 = vmul.f32 %v579, %v565
    %v589 = vmul.f32 %v587, %v565
    %v590 = vmul.f32 %v566, %v566
    %v591 = vmul.f32 %v567, %v567
    %v592 = vsub.f32 %v588, %v590
    %v593 = vsub.f32 %v589, %v591
    %v594 = vld [vmem:[%s2] sm:$0x3]
    %v595 = vmax.f32 %v592, 0.0
    %v596 = vmax.f32 %v593, 0.0
    %v597 = vadd.f32 %v595, 1e-05
    %v598 = vadd.f32 %v596, 1e-05
    %v599 = vrsqrt.pop %v597
    %v600 = vrsqrt.pop %v598
    %v603 = vcombine.low %v599, %v600
    %v605 = vunpack.c.l.s4 1966171168
    %v606 = vunpack.c.0.s8 %v605
    %v607 = vlaneseq
    %v608 = vshrl.u32 %v607, 7
    %v609 = vsub.s32 %v606, %v608
    %v610 = vrot.slane %v603, %v609
    %v612 = vunpack.c.l.s4 1966171168
    %v613 = vunpack.c.0.s8 %v612
    %v614 = vlaneseq
    %v615 = vshrl.u32 %v614, 7
    %v616 = vsub.s32 %v613, %v615
    %v617 = vrot.slane %v610, %v616
    %v619 = vmul.f32 %v594, %v617
    %v620 = vld [vmem:[%s3] sm:$0x3]
    %v622 = vlaneseq
    %v623 = vshrl.u32 %v622, 7
    %v624 = vsub.s32 0, %v623
    %v625 = vrot.slane %v619, %v624
    %v626 = vlaneseq
    %v627 = vshrl.u32 %v626, 7
    %v628 = vsub.s32 1, %v627
    %v629 = vrot.slane %v619, %v628
    %v632 = vmul.f32 %v566, %v625
    %v633 = vmul.f32 %v567, %v629
    %v636 = vcombine.low %v632, %v633
    %v638 = vunpack.c.l.s4 1966171168
    %v639 = vunpack.c.0.s8 %v638
    %v640 = vlaneseq
    %v641 = vshrl.u32 %v640, 7
    %v642 = vsub.s32 %v639, %v641
    %v643 = vrot.slane %v636, %v642
    %v645 = vunpack.c.l.s4 1966171168
    %v646 = vunpack.c.0.s8 %v645
    %v647 = vlaneseq
    %v648 = vshrl.u32 %v647, 7
    %v649 = vsub.s32 %v646, %v648
    %v650 = vrot.slane %v643, %v649
    %v652 = vsub.f32 %v620, %v650
    %v653 = vmul.f32 %v540, %v625
    %v654 = vmul.f32 %v542, %v629
    %v655 = vmul.f32 %v544, %v625
    %v656 = vmul.f32 %v546, %v629
    %v658 = vlaneseq
    %v659 = vshrl.u32 %v658, 7
    %v660 = vsub.s32 0, %v659
    %v661 = vrot.slane %v652, %v660
    %v662 = vlaneseq
    %v663 = vshrl.u32 %v662, 7
    %v664 = vsub.s32 1, %v663
    %v665 = vrot.slane %v652, %v664
    %v668 = vadd.f32 %v653, %v661
    %v669 = vadd.f32 %v654, %v665
    %v670 = vadd.f32 %v655, %v661
    %v671 = vadd.f32 %v656, %v665
    %v672 = vmax.f32 %v668, 0.0
    %v673 = vmax.f32 %v669, 0.0
    %v674 = vmax.f32 %v670, 0.0
    %v675 = vmax.f32 %v671, 0.0
    %v676 = vpack.c.bf16 %v674, %v672
    %v677 = vpack.c.bf16 %v675, %v673
    %v678 = vld [vmem:[#allocation7] sm:$0xf]
    %v679 = vld [vmem:[#allocation7 + $0x4] sm:$0xf]
    %v680 = vld [vmem:[#allocation7 + $0x8] sm:$0xf]
    %v681 = vld [vmem:[#allocation7 + $0xc] sm:$0xf]
    %v682 = vld [vmem:[#allocation7 + $0x10] sm:$0xf]
    %v683 = vld [vmem:[#allocation7 + $0x14] sm:$0xf]
    %v684 = vld [vmem:[#allocation7 + $0x18] sm:$0xf]
    %v685 = vld [vmem:[#allocation7 + $0x1c] sm:$0xf]
    %v686 = vld [vmem:[#allocation7 + $0x20] sm:$0xf]
    %v687 = vld [vmem:[#allocation7 + $0x24] sm:$0xf]
    %v688 = vld [vmem:[#allocation7 + $0x28] sm:$0xf]
    %v689 = vld [vmem:[#allocation7 + $0x2c] sm:$0xf]
    %v690 = vld [vmem:[#allocation7 + $0x30] sm:$0xf]
    %v691 = vld [vmem:[#allocation7 + $0x34] sm:$0xf]
    %v692 = vld [vmem:[#allocation7 + $0x38] sm:$0xf]
    %v693 = vld [vmem:[#allocation7 + $0x3c] sm:$0xf]
    %v694 = vld [vmem:[#allocation7 + $0x40] sm:$0xf]
    %v695 = vld [vmem:[#allocation7 + $0x44] sm:$0xf]
    %v696 = vld [vmem:[#allocation7 + $0x48] sm:$0xf]
    %v697 = vld [vmem:[#allocation7 + $0x4c] sm:$0xf]
    %v698 = vld [vmem:[#allocation7 + $0x50] sm:$0xf]
    %v699 = vld [vmem:[#allocation7 + $0x54] sm:$0xf]
    %v700 = vld [vmem:[#allocation7 + $0x58] sm:$0xf]
    %v701 = vld [vmem:[#allocation7 + $0x5c] sm:$0xf]
    %v702 = vld [vmem:[#allocation7 + $0x60] sm:$0xf]
    %v703 = vld [vmem:[#allocation7 + $0x64] sm:$0xf]
    %v704 = vld [vmem:[#allocation7 + $0x68] sm:$0xf]
    %v705 = vld [vmem:[#allocation7 + $0x6c] sm:$0xf]
    %v706 = vld [vmem:[#allocation7 + $0x70] sm:$0xf]
    %v707 = vld [vmem:[#allocation7 + $0x74] sm:$0xf]
    %v708 = vld [vmem:[#allocation7 + $0x78] sm:$0xf]
    %v709 = vld [vmem:[#allocation7 + $0x7c] sm:$0xf]
    %v710 = vld [vmem:[%s5] sm:$0x1]
    %v712 = vlaneseq
    %v713 = vshrl.u32 %v712, 7
    %v714 = vsub.s32 0, %v713
    %v715 = vrot.slane %v710, %v714
    %v749 = vunpack.c.l.b16 %v678
    %v750 = vunpack.c.l.b16 %v679
    %v751 = vunpack.c.l.b16 %v680
    %v752 = vunpack.c.l.b16 %v681
    %v753 = vunpack.c.l.b16 %v682
    %v754 = vunpack.c.l.b16 %v683
    %v755 = vunpack.c.l.b16 %v684
    %v756 = vunpack.c.l.b16 %v685
    %v757 = vunpack.c.l.b16 %v686
    %v758 = vunpack.c.l.b16 %v687
    %v759 = vunpack.c.l.b16 %v688
    %v760 = vunpack.c.l.b16 %v689
    %v761 = vunpack.c.l.b16 %v690
    %v762 = vunpack.c.l.b16 %v691
    %v763 = vunpack.c.l.b16 %v692
    %v764 = vunpack.c.l.b16 %v693
    %v765 = vunpack.c.l.b16 %v694
    %v766 = vunpack.c.l.b16 %v695
    %v767 = vunpack.c.l.b16 %v696
    %v768 = vunpack.c.l.b16 %v697
    %v769 = vunpack.c.l.b16 %v698
    %v770 = vunpack.c.l.b16 %v699
    %v771 = vunpack.c.l.b16 %v700
    %v772 = vunpack.c.l.b16 %v701
    %v773 = vunpack.c.l.b16 %v702
    %v774 = vunpack.c.l.b16 %v703
    %v775 = vunpack.c.l.b16 %v704
    %v776 = vunpack.c.l.b16 %v705
    %v777 = vunpack.c.l.b16 %v706
    %v778 = vunpack.c.l.b16 %v707
    %v779 = vunpack.c.l.b16 %v708
    %v780 = vunpack.c.l.b16 %v709
    %v781 = vpack.c.b16 %v750, %v749
    %v782 = vpack.c.b16 %v752, %v751
    %v783 = vpack.c.b16 %v754, %v753
    %v784 = vpack.c.b16 %v756, %v755
    %v785 = vpack.c.b16 %v758, %v757
    %v786 = vpack.c.b16 %v760, %v759
    %v787 = vpack.c.b16 %v762, %v761
    %v788 = vpack.c.b16 %v764, %v763
    %v789 = vpack.c.b16 %v766, %v765
    %v790 = vpack.c.b16 %v768, %v767
    %v791 = vpack.c.b16 %v770, %v769
    %v792 = vpack.c.b16 %v772, %v771
    %v793 = vpack.c.b16 %v774, %v773
    %v794 = vpack.c.b16 %v776, %v775
    %v795 = vpack.c.b16 %v778, %v777
    %v796 = vpack.c.b16 %v780, %v779
    %813 = vmatprep.subr.bf16.mxu0 0
    %814 = vmatpush1.bf16.msra.mxu0 %v781
    %815 = vmatprep.subr.bf16.mxu0 0
    %816 = vmatpush1.bf16.msra.mxu0 %v782
    %817 = vmatprep.subr.bf16.mxu0 0
    %818 = vmatpush1.bf16.msra.mxu0 %v783
    %819 = vmatprep.subr.bf16.mxu0 0
    %820 = vmatpush1.bf16.msra.mxu0 %v784
    %821 = vmatprep.subr.bf16.mxu0 0
    %822 = vmatpush1.bf16.msra.mxu0 %v785
    %823 = vmatprep.subr.bf16.mxu0 0
    %824 = vmatpush1.bf16.msra.mxu0 %v786
    %825 = vmatprep.subr.bf16.mxu0 0
    %826 = vmatpush1.bf16.msra.mxu0 %v787
    %827 = vmatprep.subr.bf16.mxu0 0
    %828 = vmatpush1.bf16.msra.mxu0 %v788
    %829 = vmatprep.subr.bf16.mxu0 0
    %830 = vmatpush1.bf16.msra.mxu0 %v789
    %831 = vmatprep.subr.bf16.mxu0 0
    %832 = vmatpush1.bf16.msra.mxu0 %v790
    %833 = vmatprep.subr.bf16.mxu0 0
    %834 = vmatpush1.bf16.msra.mxu0 %v791
    %835 = vmatprep.subr.bf16.mxu0 0
    %836 = vmatpush1.bf16.msra.mxu0 %v792
    %837 = vmatprep.subr.bf16.mxu0 0
    %838 = vmatpush1.bf16.msra.mxu0 %v793
    %839 = vmatprep.subr.bf16.mxu0 0
    %840 = vmatpush1.bf16.msra.mxu0 %v794
    %841 = vmatprep.subr.bf16.mxu0 0
    %842 = vmatpush1.bf16.msra.mxu0 %v795
    %843 = vmatprep.subr.bf16.mxu0 0
    %844 = vmatpush1.bf16.msra.mxu0 %v796
    %845 = vmatprep.mubr.bf16.mxu0 %v677
    %846 = vmatmul.mubr.bf16.gmra.mrb[0].mxu0 %v676
    %v847 = vpop.f32.mrb[0].mxu0
    %v848 = vadd.f32 %v715, %v847
    %v849 = vpop.f32.mrb[0].mxu0
    %v850 = vpop.f32.mrb[0].mxu0
    %v851 = vadd.f32 %v715, %v850
    %v852 = vpop.f32.mrb[0].mxu0
    %853 = vdwg.mxu0
    %854 = vmax.xlane.f32.xlu0 %v848
    %v855 = vpop.xlane.xlu0 %854
    %v856 = vsel %vm548, %v851, -inf
    %857 = vmax.xlane.f32.xlu0 %v856
    %v858 = vpop.xlane.xlu0 %857
    %v859 = vsub.f32 %v848, %v855
    %v860 = vsub.f32 %v851, %v858
    %v861 = vmul.f32 %v859, 1.442695
    %v862 = vpow.pop %v861
    %v863 = vmul.f32 %v860, 1.442695
    %v864 = vpow.pop %v863
    %865 = vadd.xlane.f32.xlu0 %v862
    %v866 = vpop.xlane.xlu0 %865
    %v867 = vsel %vm548, %v864, 0.0
    %868 = vadd.xlane.f32.xlu0 %v867
    %v869 = vpop.xlane.xlu0 %868
    %v870 = vrcp.pop %v866
    %v871 = vrcp.pop %v869
    %v872 = vmul.f32 %v862, %v870
    %v873 = vmul.f32 %v864, %v871
    %vm874 = vcmask 80896
    %875 = vst.msk [vmem:[#allocation8] sm:$0xff] %vm874, %v872
    %vm876 = vcmask 76800
    %877 = vst.msk [vmem:[#allocation8 + $0x8] sm:$0xf] %vm876, %v873
    // Predicated region
    $region38: #{tpu_custom_call.1} parent=1 // pred_check
      _
    $region39: #{tpu_custom_call.1} parent=1 // pred_check_branch
      %879 = sbr.rel (0) target = $region41
    $region40: #{tpu_custom_call.1} parent=1 // pred_region
      %s881 = ssub.s32 256, 256
      %882 = vsyncadd [#allocation4], %s881
      %s883 = sshll.u32 [#allocation8], 4
      %s884 = int_to_ptr.vmem [resolvable:$true] %s883
      %889 = dma.vmem_to_hbm [thread:$0]  %s884, 256, %s6, [#allocation4], 128, 128, 8
    $region41: #{tpu_custom_call.1} parent=1 // pred_fallthru
      _
    // Predicated region
    $region42: #{tpu_custom_call.1} parent=1 // pred_check
      _
    $region43: #{tpu_custom_call.1} parent=1 // pred_check_branch
      %891 = sbr.rel (0) target = $region45
    $region44: #{tpu_custom_call.1} parent=1 // pred_region
      %892 = dma.done [#allocation4], 256
    $region45: #{tpu_custom_call.1} parent=1 // pred_fallthru
      _
    %893 = vsyncpa [#allocation3], 1
    %894 = vsyncpa [#allocation6], 1
    %895 = vsyncpa [#allocation4], 1

</llo_original>
